<compile_context>
chip_gen: v7x
topology: tpu7x:2x2x1
jax: 0.10.0
libtpu: 0.0.40
codegen_flags: <defaults>
</compile_context>

<pallas_src>
import math

import numpy as np
import jax
import jax.numpy as jnp
from jax import lax
from jax.experimental import pallas as pl
from jax.experimental.pallas import tpu as pltpu


_GATHER_ROWS = 16                      # rows gathered per grid step (sublane-aligned out block)
_VMEM_LIMIT = 32 * 1024 * 1024         # safe on all generations (v7x scoped default is 32 MiB)


def _round_up(x, m):
    return ((x + m - 1) // m) * m


def _pad_and_tile(dim, max_tile):
    """Pad `dim` to a lane-friendly size and pick a tile (multiple of 128) that divides it."""
    assert max_tile % 128 == 0
    padded = _round_up(max(dim, 1), 128)
    if padded <= max_tile:
        return padded, padded
    return _round_up(dim, max_tile), max_tile


def _adj_operand_dtypes():
    """Generation-specific dtypes for the 0/1 adjacency matmul (exact in every choice)."""
    try:
        kind = jax.devices()[0].device_kind.lower()
    except Exception:
        kind = ""
    if "v7" in kind:
        return jnp.float8_e4m3fn, jnp.float32      # v7x MXU: fp8, no integer path
    if "v5" in kind or "v6" in kind:
        return jnp.int8, jnp.int32                 # v5e/v6e MXU: int8 at 2x bf16 density
    return jnp.bfloat16, jnp.float32               # portable fallback


# ----------------------------------------------------------------------------
# Kernel 1: node scores + degree in one MXU pass.
#   acc[0, n] = sum_e direction*att[e] * (src[e] == n)   (direction * segment_sum)
#   acc[1, n] = sum_e 1                * (src[e] == n)   (degree == bincount(src))
# Grid: (node tiles [parallel], edge tiles [arbitrary/reduction, last]).
# Output is a single lane-dense (2, N_pad) array stored once at the last edge tile.
# ----------------------------------------------------------------------------
def _score_kernel(e_src_ref, att2_ref, out_ref, acc_ref):
    ni = pl.program_id(0)                   # node tile
    ei = pl.program_id(1)                   # edge tile (reduction)

    @pl.when(ei == 0)
    def _():
        acc_ref[...] = jnp.zeros_like(acc_ref)

    src = e_src_ref[...]                    # (te, 1) int32, padded edges hold -1
    att2 = att2_ref[...]                    # (2, te) f32: row0 = direction*att, row1 = valid
    te = src.shape[0]
    tn = acc_ref.shape[1]
    node_ids = lax.broadcasted_iota(jnp.int32, (te, tn), 1) + ni * tn
    mask = (src == node_ids).astype(jnp.float32)          # (te, tn) one-hot per edge
    acc_ref[...] += jnp.dot(att2, mask, preferred_element_type=jnp.float32)

    @pl.when(ei == pl.num_programs(1) - 1)
    def _():
        out_ref[...] = acc_ref[...]         # single lane-dense (2, tn) store


def segment_scores(e_src, attention, n_nodes, direction=1.0,
                   *, max_node_tile=512, max_edge_tile=512):
    n_edges = int(e_src.shape[0])
    n_pad, tn = _pad_and_tile(n_nodes, max_node_tile)
    e_pad, te = _pad_and_tile(n_edges, max_edge_tile)

    # Padded edges get src = -1 (matches no node) and zero attention / zero "ones" column.
    src_col = jnp.full((e_pad, 1), -1, jnp.int32).at[:n_edges, 0].set(e_src.astype(jnp.int32))
    att2 = jnp.zeros((2, e_pad), jnp.float32)
    att2 = att2.at[0, :n_edges].set(float(direction) * attention.astype(jnp.float32))
    att2 = att2.at[1, :n_edges].set(1.0)

    out = pl.pallas_call(
        _score_kernel,
        out_shape=jax.ShapeDtypeStruct((2, n_pad), jnp.float32),
        grid_spec=pltpu.PrefetchScalarGridSpec(
            num_scalar_prefetch=0,
            grid=(n_pad // tn, e_pad // te),
            in_specs=[pl.BlockSpec((te, 1), lambda ni, ei: (ei, 0)),
                      pl.BlockSpec((2, te), lambda ni, ei: (0, ei))],
            out_specs=pl.BlockSpec((2, tn), lambda ni, ei: (0, ni)),
            scratch_shapes=[pltpu.VMEM((2, tn), jnp.float32)],
        ),
        compiler_params=pltpu.CompilerParams(
            dimension_semantics=("parallel", "arbitrary"),
            vmem_limit_bytes=_VMEM_LIMIT),
    )(src_col, att2)
    return out[0, :n_nodes], out[1, :n_nodes]


# ----------------------------------------------------------------------------
# Kernel 2: x[perm] via manual-DMA row gather (P4 pattern).
#   perm is scalar-prefetched into SMEM; x stays in HBM (memory_space=pl.ANY);
#   each grid step DMAs _GATHER_ROWS arbitrary rows straight into the lane-dense
#   output block (no intermediate VMEM buffer / copy).
# ----------------------------------------------------------------------------
def _gather_kernel(perm_ref, x_hbm_ref, out_ref, sem_ref):
    base = pl.program_id(0) * _GATHER_ROWS
    for j in range(_GATHER_ROWS):                       # static unroll: all DMAs in flight
        pltpu.make_async_copy(x_hbm_ref.at[perm_ref[base + j]],
                              out_ref.at[j], sem_ref.at[j]).start()
    for j in range(_GATHER_ROWS):
        pltpu.make_async_copy(x_hbm_ref.at[0],
                              out_ref.at[j], sem_ref.at[j]).wait()


def gather_rows(x, perm_padded):
    n, f = x.shape
    assert f % 128 == 0                                  # lane-dense rows (padded by caller)
    k_pad = int(perm_padded.shape[0])
    assert k_pad % _GATHER_ROWS == 0

    return pl.pallas_call(
        _gather_kernel,
        out_shape=jax.ShapeDtypeStruct((k_pad, f), x.dtype),
        grid_spec=pltpu.PrefetchScalarGridSpec(
            num_scalar_prefetch=1,
            grid=(k_pad // _GATHER_ROWS,),
            in_specs=[pl.BlockSpec(memory_space=pl.ANY)],
            out_specs=pl.BlockSpec((_GATHER_ROWS, f), lambda i, perm: (i, 0)),
            scratch_shapes=[pltpu.SemaphoreType.DMA((_GATHER_ROWS,))],
        ),
        compiler_params=pltpu.CompilerParams(dimension_semantics=("parallel",)),
    )(perm_padded.astype(jnp.int32), x)


# ----------------------------------------------------------------------------
# Kernel 3: fused augment_adj + filter_adj.
#   adj_sel = (A[perm, :] @ A[:, perm]) > 0, tiled matmul with int8 (v5e/v6e) /
#   fp8 (v7x) / bf16 (fallback) operands, int32/f32 accumulation, int8 output.
# ----------------------------------------------------------------------------
def _adj2_kernel(g_ref, h_ref, out_ref, acc_ref):
    @pl.when(pl.program_id(2) == 0)
    def _():
        acc_ref[...] = jnp.zeros_like(acc_ref)

    acc_ref[...] += jnp.dot(g_ref[...], h_ref[...],
                            preferred_element_type=acc_ref.dtype)

    @pl.when(pl.program_id(2) == pl.num_programs(2) - 1)
    def _():
        out_ref[...] = jnp.where(acc_ref[...] > 0, jnp.int8(1), jnp.int8(0))


def two_hop_filtered_adj(g_rows, h_cols, tile_m, tile_n, tile_k, acc_dtype):
    kp, np_ = g_rows.shape
    assert h_cols.shape == (np_, kp)
    assert kp % tile_m == 0 and kp % tile_n == 0 and np_ % tile_k == 0
    return pl.pallas_call(
        _adj2_kernel,
        out_shape=jax.ShapeDtypeStruct((kp, kp), jnp.int8),
        grid_spec=pltpu.PrefetchScalarGridSpec(
            num_scalar_prefetch=0,
            grid=(kp // tile_m, kp // tile_n, np_ // tile_k),
            in_specs=[pl.BlockSpec((tile_m, tile_k), lambda i, j, k: (i, k)),
                      pl.BlockSpec((tile_k, tile_n), lambda i, j, k: (k, j))],
            out_specs=pl.BlockSpec((tile_m, tile_n), lambda i, j, k: (i, j)),
            scratch_shapes=[pltpu.VMEM((tile_m, tile_n), acc_dtype)],
        ),
        compiler_params=pltpu.CompilerParams(
            dimension_semantics=("parallel", "parallel", "arbitrary"),
            vmem_limit_bytes=_VMEM_LIMIT),
    )(g_rows, h_cols)


# ----------------------------------------------------------------------------
# Pooling.forward
# Returns: x[perm], padded new edge_index [2, K*K], num_new_edges (device scalar),
#          batch[perm], perm.reshape(1, -1)
# ----------------------------------------------------------------------------
def pooling_forward(x, edge_index, attention, batch, *, rate, direction=1, num_graphs=None):
    n_nodes, n_feat = x.shape
    e_src = edge_index[0].astype(jnp.int32)
    e_dst = edge_index[1].astype(jnp.int32)

    # 1) node scores (Pallas kernel 1)
    node_scores, _degree = segment_scores(e_src, attention, n_nodes, direction)

    # 2) top-k per graph (contiguous, equal-size graphs => static k)
    # TODO(synk): ragged / non-contiguous per-graph top-k needs dynamic shapes.
    if num_graphs is None:
        num_graphs = int(jax.device_get(batch).max()) + 1   # setup-time sync; pass explicitly to avoid
    nodes_per_graph = n_nodes // num_graphs
    k = int(math.ceil(rate * nodes_per_graph))
    scores_2d = node_scores.reshape(num_graphs, nodes_per_graph)
    _, local = lax.top_k(scores_2d, k)
    perm = (local + (jnp.arange(num_graphs) * nodes_per_graph)[:, None]).reshape(-1).astype(jnp.int32)
    n_keep = num_graphs * k

    # 3) x[perm] via DMA row gather (Pallas kernel 2) -- exact, no one-hot matmul.
    #    Feature dim padded to a multiple of 128 so row DMAs are >=512 B and output is lane-dense.
    f_pad = _round_up(n_feat, 128)
    x_pad = x if f_pad == n_feat else jnp.pad(x, ((0, 0), (0, f_pad - n_feat)))
    k_pad = _round_up(n_keep, _GATHER_ROWS)
    perm_padded = jnp.zeros((k_pad,), jnp.int32).at[:n_keep].set(perm)
    x_sel = gather_rows(x_pad, perm_padded)[:n_keep, :n_feat]

    # 4) fused augment_adj + filter_adj (Pallas kernel 3)
    #    Scatter the already row/column-gathered adjacency operands directly (0/1, exact in all
    #    chosen dtypes); the dense N x N adjacency is never built.
    op_dtype, acc_dtype = _adj_operand_dtypes()
    kp, tile_keep = _pad_and_tile(n_keep, 512)
    np_pad, tile_node = _pad_and_tile(n_nodes, 1024)
    inv = jnp.full((n_nodes,), kp, jnp.int32).at[perm].set(jnp.arange(n_keep, dtype=jnp.int32))
    g_rows = jnp.zeros((kp, np_pad), jnp.int8).at[inv[e_src], e_dst].set(1, mode='drop').astype(op_dtype)
    h_cols = jnp.zeros((np_pad, kp), jnp.int8).at[e_src, inv[e_dst]].set(1, mode='drop').astype(op_dtype)
    adj_sel = two_hop_filtered_adj(g_rows, h_cols, tile_keep, tile_keep, tile_node, acc_dtype)
    adj_sel = adj_sel[:n_keep, :n_keep]

    # 5) padded, static-max-length edge list + valid count (all on device, no host sync)
    rows, cols = jnp.nonzero(adj_sel > 0, size=n_keep * n_keep, fill_value=-1)
    edge_index_new = jnp.stack([rows, cols]).astype(jnp.int32)
    num_edges_new = jnp.sum(adj_sel > 0).astype(jnp.int32)

    batch_new = batch[perm]
    return x_sel, edge_index_new, num_edges_new, batch_new, perm.reshape(1, -1)


# ----------------------------------------------------------------------------
if __name__ == "__main__":
    key = jax.random.PRNGKey(0)
    kx, ks, kd, ka = jax.random.split(key, 4)

    N, F = 16, 32
    num_graphs = 2
    npg = N // num_graphs
    rate = 0.5

    # bidirectional ring within each graph (guarantees every node has out-edges)
    src_l, dst_l = [], []
    for g in range(num_graphs):
        base = g * npg
        for i in range(npg):
            src_l += [base + i, base + (i + 1) % npg]
            dst_l += [base + (i + 1) % npg, base + i]
    # plus 8 random within-graph edges per graph
    r_src = jax.random.randint(ks, (num_graphs * 8,), 0, npg)
    r_dst = jax.random.randint(kd, (num_graphs * 8,), 0, npg)
    rs, rd = [], []
    for g in range(num_graphs):
        rs.append(r_src[g * 8:(g + 1) * 8] + g * npg)
        rd.append(r_dst[g * 8:(g + 1) * 8] + g * npg)
    src = jnp.concatenate([jnp.array(src_l, jnp.int32)] + rs).astype(jnp.int32)
    dst = jnp.concatenate([jnp.array(dst_l, jnp.int32)] + rd).astype(jnp.int32)
    edge_index = jnp.stack([src, dst])                        # [2, E], E = 48

    E = edge_index.shape[1]
    x = jax.random.normal(kx, (N, F), jnp.float32)
    attention = jax.random.uniform(ka, (E,), jnp.float32)
    batch = jnp.repeat(jnp.arange(num_graphs, dtype=jnp.int32), npg)

    x_new, ei_new, n_e_new, batch_new, perm = pooling_forward(
        x, edge_index, attention, batch, rate=rate, direction=1, num_graphs=num_graphs)
    jax.block_until_ready((x_new, ei_new, n_e_new, batch_new, perm))

    # ---- sanity checks against pure references (host-side, test only) ----
    perm_flat = np.asarray(perm).reshape(-1)
    K = perm_flat.shape[0]

    # x[perm] must be bit-exact (DMA gather)
    np.testing.assert_array_equal(np.asarray(x_new), np.asarray(x)[perm_flat])

    # scores / degree from kernel 1
    ker_scores, ker_degree = segment_scores(src, attention, N, 1.0)
    ref_scores = jnp.zeros(N, jnp.float32).at[src].add(attention)      # direction * segment_sum
    ref_degree = jnp.zeros(N, jnp.float32).at[src].add(1.0)
    np.testing.assert_allclose(np.asarray(ker_scores), np.asarray(ref_scores),
                               rtol=1e-5, atol=1e-6)
    np.testing.assert_allclose(np.asarray(ker_degree), np.asarray(ref_degree), atol=1e-6)

    # 2-hop filtered adjacency vs numpy reference
    n_e = int(n_e_new)
    ei_np = np.asarray(ei_new)[:, :n_e]
    adj_kernel = np.zeros((K, K), bool)
    adj_kernel[ei_np[0], ei_np[1]] = True
    A = np.zeros((N, N), np.int64)
    A[np.asarray(src), np.asarray(dst)] = 1
    ref_sel = (A @ A)[perm_flat][:, perm_flat] > 0
    assert np.array_equal(adj_kernel, ref_sel)

    # batch relabeling
    np.testing.assert_array_equal(np.asarray(batch_new), np.asarray(batch)[perm_flat])
    assert ei_new.shape == (2, K * K) and batch_new.shape == (K,)

    print("KERNEL_OK")
</pallas_src>

<mosaic_0001>
module attributes {stable_mosaic.version = 11 : i64} {
  func.func @_score_kernel(%arg0: i32, %arg1: i32, %arg2: memref<128x1xi32, #tpu.memory_space<vmem>>, %arg3: memref<2x128xf32, #tpu.memory_space<vmem>>, %arg4: memref<2x128xf32, #tpu.memory_space<vmem>>, %arg5: memref<2x128xf32, #tpu.memory_space<vmem>>) attributes {dimension_semantics = [#tpu.dimension_semantics<parallel>, #tpu.dimension_semantics<arbitrary>], iteration_bounds = array<i64: 1, 1>, scalar_prefetch = 0 : i64, scratch_operands = 1 : i64, tpu.core_type = #tpu.core_type<tc>, window_params = [{transform_indices = @transform_0, window_bounds = array<i64: 128, 1>}, {transform_indices = @transform_1, window_bounds = array<i64: 2, 128>}, {transform_indices = @transform_2, window_bounds = array<i64: 2, 128>}]} {
    %c0_i32 = arith.constant 0 : i32
    %0 = arith.cmpi eq, %arg1, %c0_i32 : i32
    %1 = arith.extui %0 : i1 to i32
    %c0_i32_0 = arith.constant 0 : i32
    %2 = arith.cmpi ne, %1, %c0_i32_0 : i32
    scf.if %2 {
      %cst_10 = arith.constant 0.000000e+00 : f32
      %20 = vector.broadcast %cst_10 : f32 to vector<2x128xf32>
      %c0_11 = arith.constant 0 : index
      %c0_12 = arith.constant 0 : index
      %21 = vector.load %arg5[%c0_11, %c0_12] : memref<2x128xf32, #tpu.memory_space<vmem>>, vector<2x128xf32>
      tpu.vector_store %arg5[%c0_11, %c0_12], %20 {strides = array<i32>} : memref<2x128xf32, #tpu.memory_space<vmem>>, vector<2x128xf32>,
    } else {
    }
    %c0 = arith.constant 0 : index
    %c0_1 = arith.constant 0 : index
    %3 = vector.load %arg2[%c0, %c0_1] : memref<128x1xi32, #tpu.memory_space<vmem>>, vector<128x1xi32>
    %c0_2 = arith.constant 0 : index
    %c0_3 = arith.constant 0 : index
    %4 = vector.load %arg3[%c0_2, %c0_3] : memref<2x128xf32, #tpu.memory_space<vmem>>, vector<2x128xf32>
    %5 = tpu.iota {dimensions = array<i32: 1>} : vector<128x128xi32>
    %c128_i32 = arith.constant 128 : i32
    %6 = arith.muli %arg0, %c128_i32 : i32
    %7 = vector.broadcast %6 : i32 to vector<128x128xi32>
    %8 = arith.addi %5, %7 : vector<128x128xi32>
    %9 = vector.broadcast %3 : vector<128x1xi32> to vector<128x128xi32>
    %10 = arith.cmpi eq, %9, %8 : vector<128x128xi32>
    %11 = arith.extui %10 : vector<128x128xi1> to vector<128x128xi32>
    %12 = arith.sitofp %11 : vector<128x128xi32> to vector<128x128xf32>
    %c0_4 = arith.constant 0 : index
    %c0_5 = arith.constant 0 : index
    %13 = vector.load %arg5[%c0_4, %c0_5] : memref<2x128xf32, #tpu.memory_space<vmem>>, vector<2x128xf32>
    %cst = arith.constant dense<0.000000e+00> : vector<2x128xf32>
    %14 = tpu.matmul %4, %12, %cst {dimension_numbers = #tpu.dot_dimension_numbers<[1], [0], [0], [1], [0, 0, 1, 1], [], []>} : vector<2x128xf32>, vector<128x128xf32>, vector<2x128xf32> -> vector<2x128xf32>
    %15 = arith.addf %13, %14 : vector<2x128xf32>
    %c0_6 = arith.constant 0 : index
    %c0_7 = arith.constant 0 : index
    %16 = vector.load %arg5[%c0_6, %c0_7] : memref<2x128xf32, #tpu.memory_space<vmem>>, vector<2x128xf32>
    tpu.vector_store %arg5[%c0_6, %c0_7], %15 {strides = array<i32>} : memref<2x128xf32, #tpu.memory_space<vmem>>, vector<2x128xf32>,
    %c0_i32_8 = arith.constant 0 : i32
    %17 = arith.cmpi eq, %arg1, %c0_i32_8 : i32
    %18 = arith.extui %17 : i1 to i32
    %c0_i32_9 = arith.constant 0 : i32
    %19 = arith.cmpi ne, %18, %c0_i32_9 : i32
    scf.if %19 {
      %c0_10 = arith.constant 0 : index
      %c0_11 = arith.constant 0 : index
      %20 = vector.load %arg5[%c0_10, %c0_11] : memref<2x128xf32, #tpu.memory_space<vmem>>, vector<2x128xf32>
      %c0_12 = arith.constant 0 : index
      %c0_13 = arith.constant 0 : index
      %21 = vector.load %arg4[%c0_12, %c0_13] : memref<2x128xf32, #tpu.memory_space<vmem>>, vector<2x128xf32>
      tpu.vector_store %arg4[%c0_12, %c0_13], %20 {strides = array<i32>} : memref<2x128xf32, #tpu.memory_space<vmem>>, vector<2x128xf32>,
    } else {
    }
    return
  }
  func.func @transform_0(%arg0: i32, %arg1: i32) -> (i32, i32) {
    %c0_i32 = arith.constant 0 : i32
    %c0_i32_0 = arith.constant 0 : i32
    return %arg1, %c0_i32 : i32, i32
  }
  func.func @transform_1(%arg0: i32, %arg1: i32) -> (i32, i32) {
    %c0_i32 = arith.constant 0 : i32
    %c0_i32_0 = arith.constant 0 : i32
    return %c0_i32, %arg1 : i32, i32
  }
  func.func @transform_2(%arg0: i32, %arg1: i32) -> (i32, i32) {
    %c0_i32 = arith.constant 0 : i32
    %c0_i32_0 = arith.constant 0 : i32
    return %c0_i32, %arg0 : i32, i32
  }
}

</mosaic_0001>

<llo_original>
// kernel: tpu_custom_call.1
$region0: #{tpu_custom_call.1}
  #allocation0 [shape = 'u32[]', space=smem, size = 0x4, offset = 0x4, fixed_abs, tag = 'smem constant byte address 0x4 - core index']
  #allocation1 [shape = 'u32[144,128]{1,0:T(1,128)}', space=vmem, size = 0x12000, scoped, tag = 'internal scratch']
  #allocation2 [shape = 'f32[2,128]{1,0:T(2,128)}', space=vmem, size = 0x400, scoped, tag = 'scratch operand']
  %s0 = inlined_call_operand.vmem [shape: s32[128,1], index: 0, kind: input, shape index: {}]
  %s1 = inlined_call_operand.vmem [shape: f32[2,128], index: 1, kind: input, shape index: {}]
  %s2 = inlined_call_operand.hbm [shape: f32[2,128], index: 2, kind: output, shape index: {}]
  %s3 = sld [smem:[#allocation0]]
  $region26: #{tpu_custom_call.1} parent=0
    _
  %s5 = ssub.s32 1, %s3
  %s6 = scalar_select 0, %s5, %s3
  $region1: #{tpu_custom_call.1} parent=0
    #allocation3 [shape = 'u8[1024]{0}', space=vmem, size = 0x400, scoped, tag = 'output window, operand 0, single buffered']
    #allocation4 [shape = 's32[1]{0}', space=sflag, size = 0x4, scoped, tag = 'scoped memory for tpu_custom_call.1']
    %7 = vsyncpa [#allocation4], 0
    // Predicated region
    $region2: #{tpu_custom_call.1} parent=1 // pred_check
      _
    $region3: #{tpu_custom_call.1} parent=1 // pred_check_branch
      %9 = sbr.rel (0) target = $region5
    $region4: #{tpu_custom_call.1} parent=1 // pred_region
      _
    $region5: #{tpu_custom_call.1} parent=1 // pred_fallthru
      _
    // Predicated region
    $region6: #{tpu_custom_call.1} parent=1 // pred_check
      _
    $region7: #{tpu_custom_call.1} parent=1 // pred_check_branch
      %11 = sbr.rel (0) target = $region9
    $region8: #{tpu_custom_call.1} parent=1 // pred_region
      _
    $region9: #{tpu_custom_call.1} parent=1 // pred_fallthru
      _
    %p12 = scmp.eq.s32.totalorder 0, 0
    // Predicated region
    $region10: #{tpu_custom_call.1} parent=1 // pred_check
      %p13 = pneg %p12
    $region11: #{tpu_custom_call.1} parent=1 // pred_check_branch
      %15 = sbr.rel (%p13) target = $region13
    $region12: #{tpu_custom_call.1} parent=1 // pred_region
      %16 = vst [vmem:[#allocation2] sm:$0x3] 0.0
    $region13: #{tpu_custom_call.1} parent=1 // pred_fallthru
      _
    %v17 = vld [vmem:[%s0] sm:$0xff]
    %v18 = vld [vmem:[%s0 + $0x8] sm:$0xff]
    %v19 = vld [vmem:[%s0 + $0x10] sm:$0xff]
    %v20 = vld [vmem:[%s0 + $0x18] sm:$0xff]
    %v21 = vld [vmem:[%s0 + $0x20] sm:$0xff]
    %v22 = vld [vmem:[%s0 + $0x28] sm:$0xff]
    %v23 = vld [vmem:[%s0 + $0x30] sm:$0xff]
    %v24 = vld [vmem:[%s0 + $0x38] sm:$0xff]
    %v25 = vld [vmem:[%s0 + $0x40] sm:$0xff]
    %v26 = vld [vmem:[%s0 + $0x48] sm:$0xff]
    %v27 = vld [vmem:[%s0 + $0x50] sm:$0xff]
    %v28 = vld [vmem:[%s0 + $0x58] sm:$0xff]
    %v29 = vld [vmem:[%s0 + $0x60] sm:$0xff]
    %v30 = vld [vmem:[%s0 + $0x68] sm:$0xff]
    %v31 = vld [vmem:[%s0 + $0x70] sm:$0xff]
    %v32 = vld [vmem:[%s0 + $0x78] sm:$0xff]
    %v33 = vld [vmem:[%s1] sm:$0x3]
    %v34 = vlaneseq
    %v35 = vand.u32 %v34, 127
    %s36 = smul.u32 0, 128
    %v37 = vstv %s36
    %v38 = vadd.s32 %v35, %v37
    %39 = vset.pattern.permute.xlu0 0
    %40 = vperm.xlu0 %39, %v17
    %v41 = vpop.permute.xlu0 %40
    %42 = vset.pattern.permute.xlu0 0
    %43 = vperm.xlu0 %42, %v18
    %v44 = vpop.permute.xlu0 %43
    %45 = vset.pattern.permute.xlu0 0
    %46 = vperm.xlu0 %45, %v19
    %v47 = vpop.permute.xlu0 %46
    %48 = vset.pattern.permute.xlu0 0
    %49 = vperm.xlu0 %48, %v20
    %v50 = vpop.permute.xlu0 %49
    %51 = vset.pattern.permute.xlu0 0
    %52 = vperm.xlu0 %51, %v21
    %v53 = vpop.permute.xlu0 %52
    %54 = vset.pattern.permute.xlu0 0
    %55 = vperm.xlu0 %54, %v22
    %v56 = vpop.permute.xlu0 %55
    %57 = vset.pattern.permute.xlu0 0
    %58 = vperm.xlu0 %57, %v23
    %v59 = vpop.permute.xlu0 %58
    %60 = vset.pattern.permute.xlu0 0
    %61 = vperm.xlu0 %60, %v24
    %v62 = vpop.permute.xlu0 %61
    %63 = vset.pattern.permute.xlu0 0
    %64 = vperm.xlu0 %63, %v25
    %v65 = vpop.permute.xlu0 %64
    %66 = vset.pattern.permute.xlu0 0
    %67 = vperm.xlu0 %66, %v26
    %v68 = vpop.permute.xlu0 %67
    %69 = vset.pattern.permute.xlu0 0
    %70 = vperm.xlu0 %69, %v27
    %v71 = vpop.permute.xlu0 %70
    %72 = vset.pattern.permute.xlu0 0
    %73 = vperm.xlu0 %72, %v28
    %v74 = vpop.permute.xlu0 %73
    %75 = vset.pattern.permute.xlu0 0
    %76 = vperm.xlu0 %75, %v29
    %v77 = vpop.permute.xlu0 %76
    %78 = vset.pattern.permute.xlu0 0
    %79 = vperm.xlu0 %78, %v30
    %v80 = vpop.permute.xlu0 %79
    %81 = vset.pattern.permute.xlu0 0
    %82 = vperm.xlu0 %81, %v31
    %v83 = vpop.permute.xlu0 %82
    %84 = vset.pattern.permute.xlu0 0
    %85 = vperm.xlu0 %84, %v32
    %v86 = vpop.permute.xlu0 %85
    %vm87 = vcmp.eq.s32.totalorder %v41, %v38
    %vm88 = vcmp.eq.s32.totalorder %v44, %v38
    %vm89 = vcmp.eq.s32.totalorder %v47, %v38
    %vm90 = vcmp.eq.s32.totalorder %v50, %v38
    %vm91 = vcmp.eq.s32.totalorder %v53, %v38
    %vm92 = vcmp.eq.s32.totalorder %v56, %v38
    %vm93 = vcmp.eq.s32.totalorder %v59, %v38
    %vm94 = vcmp.eq.s32.totalorder %v62, %v38
    %vm95 = vcmp.eq.s32.totalorder %v65, %v38
    %vm96 = vcmp.eq.s32.totalorder %v68, %v38
    %vm97 = vcmp.eq.s32.totalorder %v71, %v38
    %vm98 = vcmp.eq.s32.totalorder %v74, %v38
    %vm99 = vcmp.eq.s32.totalorder %v77, %v38
    %vm100 = vcmp.eq.s32.totalorder %v80, %v38
    %vm101 = vcmp.eq.s32.totalorder %v83, %v38
    %vm102 = vcmp.eq.s32.totalorder %v86, %v38
    %v103 = vsel %vm87, 1, 0
    %v104 = vsel %vm88, 1, 0
    %v105 = vsel %vm89, 1, 0
    %v106 = vsel %vm90, 1, 0
    %v107 = vsel %vm91, 1, 0
    %v108 = vsel %vm92, 1, 0
    %v109 = vsel %vm93, 1, 0
    %v110 = vsel %vm94, 1, 0
    %v111 = vsel %vm95, 1, 0
    %v112 = vsel %vm96, 1, 0
    %v113 = vsel %vm97, 1, 0
    %v114 = vsel %vm98, 1, 0
    %v115 = vsel %vm99, 1, 0
    %v116 = vsel %vm100, 1, 0
    %v117 = vsel %vm101, 1, 0
    %v118 = vsel %vm102, 1, 0
    %v119 = vcvt.s32.f32 %v103
    %v120 = vcvt.s32.f32 %v104
    %v121 = vcvt.s32.f32 %v105
    %v122 = vcvt.s32.f32 %v106
    %v123 = vcvt.s32.f32 %v107
    %v124 = vcvt.s32.f32 %v108
    %v125 = vcvt.s32.f32 %v109
    %v126 = vcvt.s32.f32 %v110
    %v127 = vcvt.s32.f32 %v111
    %v128 = vcvt.s32.f32 %v112
    %v129 = vcvt.s32.f32 %v113
    %v130 = vcvt.s32.f32 %v114
    %v131 = vcvt.s32.f32 %v115
    %v132 = vcvt.s32.f32 %v116
    %v133 = vcvt.s32.f32 %v117
    %v134 = vcvt.s32.f32 %v118
    %v135 = vld [vmem:[#allocation2] sm:$0x3]
    %136 = vmatprep.subr.mxu0 0.0
    %137 = vmatpush1.msra.mxu0 %v119
    %138 = vmatprep.subr.mxu0 0.0
    %139 = vmatpush1.msra.mxu0 %v120
    %140 = vmatprep.subr.mxu0 0.0
    %141 = vmatpush1.msra.mxu0 %v121
    %142 = vmatprep.subr.mxu0 0.0
    %143 = vmatpush1.msra.mxu0 %v122
    %144 = vmatprep.subr.mxu0 0.0
    %145 = vmatpush1.msra.mxu0 %v123
    %146 = vmatprep.subr.mxu0 0.0
    %147 = vmatpush1.msra.mxu0 %v124
    %148 = vmatprep.subr.mxu0 0.0
    %149 = vmatpush1.msra.mxu0 %v125
    %150 = vmatprep.subr.mxu0 0.0
    %151 = vmatpush1.msra.mxu0 %v126
    %152 = vmatprep.subr.mxu0 0.0
    %153 = vmatpush1.msra.mxu0 %v127
    %154 = vmatprep.subr.mxu0 0.0
    %155 = vmatpush1.msra.mxu0 %v128
    %156 = vmatprep.subr.mxu0 0.0
    %157 = vmatpush1.msra.mxu0 %v129
    %158 = vmatprep.subr.mxu0 0.0
    %159 = vmatpush1.msra.mxu0 %v130
    %160 = vmatprep.subr.mxu0 0.0
    %161 = vmatpush1.msra.mxu0 %v131
    %162 = vmatprep.subr.mxu0 0.0
    %163 = vmatpush1.msra.mxu0 %v132
    %164 = vmatprep.subr.mxu0 0.0
    %165 = vmatpush1.msra.mxu0 %v133
    %166 = vmatprep.subr.mxu0 0.0
    %167 = vmatpush1.msra.mxu0 %v134
    %168 = vmatprep.subr.mxu0 0.0
    %169 = vmatpush1.msra.mxu0 0.0
    %170 = vmatprep.subr.mxu0 0.0
    %171 = vmatpush1.msra.mxu0 0.0
    %172 = vmatprep.subr.mxu0 0.0
    %173 = vmatpush1.msra.mxu0 0.0
    %174 = vmatprep.subr.mxu0 0.0
    %175 = vmatpush1.msra.mxu0 0.0
    %176 = vmatprep.subr.mxu0 0.0
    %177 = vmatpush1.msra.mxu0 0.0
    %178 = vmatprep.subr.mxu0 0.0
    %179 = vmatpush1.msra.mxu0 0.0
    %180 = vmatprep.subr.mxu0 0.0
    %181 = vmatpush1.msra.mxu0 0.0
    %182 = vmatprep.subr.mxu0 0.0
    %183 = vmatpush1.msra.mxu0 0.0
    %184 = vmatprep.subr.mxu0 0.0
    %185 = vmatpush1.msra.mxu0 0.0
    %186 = vmatprep.subr.mxu0 0.0
    %187 = vmatpush1.msra.mxu0 0.0
    %188 = vmatprep.subr.mxu0 0.0
    %189 = vmatpush1.msra.mxu0 0.0
    %190 = vmatprep.subr.mxu0 0.0
    %191 = vmatpush1.msra.mxu0 0.0
    %192 = vmatprep.subr.mxu0 0.0
    %193 = vmatpush1.msra.mxu0 0.0
    %194 = vmatprep.subr.mxu0 0.0
    %195 = vmatpush1.msra.mxu0 0.0
    %196 = vmatprep.subr.mxu0 0.0
    %197 = vmatpush1.msra.mxu0 0.0
    %198 = vmatprep.subr.mxu0 0.0
    %199 = vmatpush1.msra.mxu0 0.0
    %200 = vmatprep.mubr.f32.mxu0 0.0
    %201 = vmatmul.mubr.f32.gmra.mrb[0].mxu0 %v33
    %v202 = vpop.f32.mrb[0].mxu0
    %v203 = vadd.f32 0.0, %v202
    %v204 = vpop.f32.mrb[0].mxu0
    %205 = vdwg.mxu0
    %v206 = vadd.f32 %v135, %v203
    %207 = vst [vmem:[#allocation2] sm:$0x3] %v206
    // Predicated region
    $region14: #{tpu_custom_call.1} parent=1 // pred_check
      %p208 = pneg %p12
    $region15: #{tpu_custom_call.1} parent=1 // pred_check_branch
      %210 = sbr.rel (%p208) target = $region17
    $region16: #{tpu_custom_call.1} parent=1 // pred_region
      %v211 = vld [vmem:[#allocation2] sm:$0x3]
      %212 = vst [vmem:[#allocation3] sm:$0x3] %v211
    $region17: #{tpu_custom_call.1} parent=1 // pred_fallthru
      _
    // Predicated region
    $region18: #{tpu_custom_call.1} parent=1 // pred_check
      _
    $region19: #{tpu_custom_call.1} parent=1 // pred_check_branch
      %214 = sbr.rel (0) target = $region21
    $region20: #{tpu_custom_call.1} parent=1 // pred_region
      %s216 = ssub.s32 32, 32
      %217 = vsyncadd [#allocation4], %s216
      %s219 = sshll.u32 [#allocation3], 4
      %s220 = int_to_ptr.vmem [resolvable:$true] %s219
      %222 = dma.vmem_to_hbm [thread:$0]  %s220, 32, %s2, [#allocation4]
    $region21: #{tpu_custom_call.1} parent=1 // pred_fallthru
      _
    // Predicated region
    $region22: #{tpu_custom_call.1} parent=1 // pred_check
      _
    $region23: #{tpu_custom_call.1} parent=1 // pred_check_branch
      %224 = sbr.rel (0) target = $region25
    $region24: #{tpu_custom_call.1} parent=1 // pred_region
      %225 = dma.done [#allocation4], 32
    $region25: #{tpu_custom_call.1} parent=1 // pred_fallthru
      _
    %226 = vsyncpa [#allocation4], 1

</llo_original>
